<compile_context>
chip_gen: v7x
topology: tpu7x:2x2x1
jax: 0.10.0
libtpu: 0.0.40
codegen_flags: <defaults>
</compile_context>

<pallas_src>
import functools

import jax
import jax.numpy as jnp
import numpy as np
from jax.experimental import pallas as pl
from jax.experimental.pallas import tpu as pltpu


_LANE = 128
_SUB = 8

_HALF_LOG_2PI = 0.9189385332046727      # 0.5 * log(2*pi)
_SHIFT = 8.0                             # Stirling series used for z >= 8
_STIRLING_C1 = 1.0 / 12.0
_STIRLING_C2 = -1.0 / 360.0
_STIRLING_C3 = 1.0 / 1260.0


# ---------------------------------------------------------------------------
# In-kernel math helpers (exp/log/approx-recip only -> safe Mosaic lowering)
# ---------------------------------------------------------------------------
def _recip(x):
    """1/x via approx EUP reciprocal + one Newton step (VALU, hidden under EUP)."""
    r0 = pl.reciprocal(x, approx=True)
    return r0 * (2.0 - x * r0)


def _lgamma(z):
    """log Gamma(z) for z > 0 (f32).

    Stirling/de-Moivre series in 1/z (3 correction terms; truncation ~3e-10 at
    z=8) with an argument shift for z < 8:
        lgamma(z) = lgamma(z + 8) - log(z (z+1) ... (z+7))
    The shift product is pure VALU; its log is always issued (1 EUP) and masked
    out with a select for z >= 8 (product is clamped so it never overflows).
    """
    small = z < _SHIFT
    zc = jnp.minimum(z, _SHIFT)          # keep the masked-out product finite
    p = zc
    for k in range(1, 8):
        p = p * (zc + float(k))
    corr = jnp.where(small, jnp.log(p), 0.0)
    zs = jnp.where(small, z + _SHIFT, z)

    u = _recip(zs)
    u2 = u * u
    series = u * (_STIRLING_C1 + u2 * (_STIRLING_C2 + u2 * _STIRLING_C3))
    return (zs - 0.5) * jnp.log(zs) - zs + _HALF_LOG_2PI + series - corr


def _log_sigmoid(x):
    """Numerically stable log(sigmoid(x)) = min(x, 0) - log(1 + exp(-|x|))."""
    return jnp.minimum(x, 0.0) - jnp.log(1.0 + jnp.exp(-jnp.abs(x)))


# ---------------------------------------------------------------------------
# Pallas kernel: one (TR, 128) tile -> (2, 8, 128) partial [sum lp, valid cnt]
# ---------------------------------------------------------------------------
def _nb_loss_kernel(eta0_ref, eta1_ref, y_ref, pop_ref, part_ref, *, batch_size):
    i = pl.program_id(0)
    eta0 = eta0_ref[...]                  # (TR, 128) f32
    eta1 = eta1_ref[...]
    y = y_ref[...]
    pop = pop_ref[...]
    tr = eta0.shape[0]

    # Validity: element index within the original batch AND y not NaN
    # (replaces torch's boolean-mask compaction; also masks the zero padding).
    row = jax.lax.broadcasted_iota(jnp.int32, (tr, _LANE), 0) + i * tr
    lane = jax.lax.broadcasted_iota(jnp.int32, (tr, _LANE), 1)
    valid = jnp.logical_and(row * _LANE + lane < batch_size,
                            jnp.logical_not(jnp.isnan(y)))

    # total_count = pop * exp(eta0) / exp(eta1), fused into a single exp.
    r = pop * jnp.exp(eta0 - eta1)
    logits = eta1

    # log_sigmoid computed once; log_sigmoid(-x) = log_sigmoid(x) - x.
    ls = _log_sigmoid(logits)
    ls_neg = ls - logits

    # torch.distributions.NegativeBinomial(total_count=r, logits=l).log_prob(k):
    #   r*logsigmoid(-l) + k*logsigmoid(l) + lgamma(r+k) - lgamma(1+k) - lgamma(r)
    lp = (r * ls_neg + y * ls
          + _lgamma(r + y) - _lgamma(1.0 + y) - _lgamma(r))
    lp = jnp.where(valid, lp, 0.0)        # select: garbage/NaN lanes -> 0
    cnt = valid.astype(jnp.float32)

    # (TR,128) -> (8,128) with plain vreg adds (no XLU lane reduce, no
    # loop-carried scalar); the cross-sublane/lane reduce happens in JAX.
    part_ref[0] = lp.reshape(tr // _SUB, _SUB, _LANE).sum(axis=0)
    part_ref[1] = cnt.reshape(tr // _SUB, _SUB, _LANE).sum(axis=0)


@functools.partial(jax.jit, static_argnames=("row_tile",))
def negative_binomial_loss(eta, y_true, population, *, row_tile=2048):
    """eta: (B, 2), y_true: (B, 1) or (B,), population: (B,). Returns scalar loss.

    row_tile is rounded down to a multiple of 8.  Double-buffered VMEM at
    row_tile=2048 is 4 inputs x 2 x 1 MiB = 8 MiB -> inside every generation's
    scoped-VMEM default (v5e 16 MiB, v6e/v7x 32 MiB).  Set
    pltpu.CompilerParams(vmem_limit_bytes=...) if pushing row_tile past ~3072.
    """
    eta = jnp.asarray(eta, jnp.float32)
    B = eta.shape[0]
    y = jnp.asarray(y_true, jnp.float32).reshape(B)
    pop = jnp.asarray(population, jnp.float32).reshape(B)

    # Lane/sublane-dense layout: pad each field once to nt * TR * 128 elements.
    rows = pl.cdiv(B, _LANE)
    rows = pl.cdiv(rows, _SUB) * _SUB                   # multiple of 8 sublanes
    tr = max(_SUB, min((int(row_tile) // _SUB) * _SUB, rows))
    nt = pl.cdiv(rows, tr)
    rpad = nt * tr
    pad = rpad * _LANE - B

    eta0 = jnp.pad(eta[:, 0], (0, pad)).reshape(rpad, _LANE)
    eta1 = jnp.pad(eta[:, 1], (0, pad)).reshape(rpad, _LANE)
    y_p = jnp.pad(y, (0, pad)).reshape(rpad, _LANE)     # tail masked in-kernel
    pop_p = jnp.pad(pop, (0, pad)).reshape(rpad, _LANE)

    parts = pl.pallas_call(
        functools.partial(_nb_loss_kernel, batch_size=B),
        grid=(nt,),
        in_specs=[pl.BlockSpec((tr, _LANE), lambda i: (i, 0)) for _ in range(4)],
        out_specs=pl.BlockSpec((None, 2, _SUB, _LANE), lambda i: (i, 0, 0, 0)),
        out_shape=jax.ShapeDtypeStruct((nt, 2, _SUB, _LANE), jnp.float32),
        compiler_params=pltpu.CompilerParams(
            dimension_semantics=("parallel",)),   # independent blocks -> both TCs on v7x
    )(eta0, eta1, y_p, pop_p)

    total = jnp.sum(parts[:, 0])
    count = jnp.sum(parts[:, 1])
    # Unguarded divide (matches reference/torch: all-NaN targets -> NaN loss).
    return -total / count


# ---------------------------------------------------------------------------
# Pure-JAX reference (for correctness check only)
# ---------------------------------------------------------------------------
def _reference_loss(eta, y_true, population):
    from jax.scipy.special import gammaln

    y = jnp.asarray(y_true, jnp.float32).reshape(-1)
    pop = jnp.asarray(population, jnp.float32).reshape(-1)
    eta = jnp.asarray(eta, jnp.float32)
    valid = ~jnp.isnan(y)
    y_s = jnp.where(valid, y, 0.0)
    pop_s = jnp.where(valid, pop, 1.0)

    total_count = pop_s * jnp.exp(eta[:, 0]) / jnp.exp(eta[:, 1])
    logits = eta[:, 1]
    lp = (
        total_count * jax.nn.log_sigmoid(-logits)
        + y_s * jax.nn.log_sigmoid(logits)
        + gammaln(total_count + y_s)
        - gammaln(1.0 + y_s)
        - gammaln(total_count)
    )
    lp = jnp.where(valid, lp, 0.0)
    return -jnp.sum(lp) / jnp.sum(valid.astype(jnp.float32))


if __name__ == "__main__":
    key = jax.random.PRNGKey(0)
    k1, k2, k3 = jax.random.split(key, 3)

    # --- test 1: small batch, single tile ---
    B = 16
    eta = jax.random.normal(k1, (B, 2), dtype=jnp.float32) * 0.5
    y_true = jnp.floor(jnp.abs(jax.random.normal(k2, (B, 1), dtype=jnp.float32)) * 20.0)
    # inject NaNs to exercise the masking path (mirrors torch's ~isnan filtering)
    y_true = y_true.at[3, 0].set(jnp.nan).at[11, 0].set(jnp.nan)
    population = jax.random.uniform(
        k3, (B,), minval=50.0, maxval=500.0, dtype=jnp.float32
    )

    loss = negative_binomial_loss(eta, y_true, population)
    jax.block_until_ready(loss)
    ref = _reference_loss(eta, y_true, population)
    np.testing.assert_allclose(np.asarray(loss), np.asarray(ref), rtol=2e-3, atol=2e-3)
    assert np.isfinite(np.asarray(loss))

    # --- test 2: forces a multi-block "parallel" grid (row_tile=8 -> 3 blocks)
    #     to exercise per-step partial outputs + in-kernel tail masking ---
    k4, k5, k6 = jax.random.split(jax.random.PRNGKey(1), 3)
    B2 = 2500
    eta2 = jax.random.normal(k4, (B2, 2), dtype=jnp.float32) * 0.5
    y2 = jnp.floor(jnp.abs(jax.random.normal(k5, (B2, 1), dtype=jnp.float32)) * 20.0)
    nan_idx = jax.random.choice(k6, B2, shape=(100,), replace=False)
    y2 = y2.at[nan_idx, 0].set(jnp.nan)
    pop2 = jax.random.uniform(
        jax.random.PRNGKey(2), (B2,), minval=50.0, maxval=500.0, dtype=jnp.float32
    )

    loss2 = negative_binomial_loss(eta2, y2, pop2, row_tile=8)
    jax.block_until_ready(loss2)
    ref2 = _reference_loss(eta2, y2, pop2)
    np.testing.assert_allclose(np.asarray(loss2), np.asarray(ref2), rtol=2e-3, atol=2e-3)
    assert np.isfinite(np.asarray(loss2))

    print("KERNEL_OK")
</pallas_src>

<mosaic_0001>
module attributes {stable_mosaic.version = 11 : i64} {
  func.func @_nb_loss_kernel(%arg0: i32, %arg1: memref<8x128xf32, #tpu.memory_space<vmem>>, %arg2: memref<8x128xf32, #tpu.memory_space<vmem>>, %arg3: memref<8x128xf32, #tpu.memory_space<vmem>>, %arg4: memref<8x128xf32, #tpu.memory_space<vmem>>, %arg5: memref<1x2x8x128xf32, #tpu.memory_space<vmem>>) attributes {dimension_semantics = [#tpu.dimension_semantics<parallel>], iteration_bounds = array<i64: 1>, scalar_prefetch = 0 : i64, scratch_operands = 0 : i64, tpu.core_type = #tpu.core_type<tc>, window_params = [{transform_indices = @transform_0, window_bounds = array<i64: 8, 128>}, {transform_indices = @transform_1, window_bounds = array<i64: 8, 128>}, {transform_indices = @transform_2, window_bounds = array<i64: 8, 128>}, {transform_indices = @transform_3, window_bounds = array<i64: 8, 128>}, {transform_indices = @transform_4, window_bounds = array<i64: 1, 2, 8, 128>}]} {
    %c0 = arith.constant 0 : index
    %c0_0 = arith.constant 0 : index
    %0 = vector.load %arg1[%c0, %c0_0] : memref<8x128xf32, #tpu.memory_space<vmem>>, vector<8x128xf32>
    %c0_1 = arith.constant 0 : index
    %c0_2 = arith.constant 0 : index
    %1 = vector.load %arg2[%c0_1, %c0_2] : memref<8x128xf32, #tpu.memory_space<vmem>>, vector<8x128xf32>
    %c0_3 = arith.constant 0 : index
    %c0_4 = arith.constant 0 : index
    %2 = vector.load %arg3[%c0_3, %c0_4] : memref<8x128xf32, #tpu.memory_space<vmem>>, vector<8x128xf32>
    %c0_5 = arith.constant 0 : index
    %c0_6 = arith.constant 0 : index
    %3 = vector.load %arg4[%c0_5, %c0_6] : memref<8x128xf32, #tpu.memory_space<vmem>>, vector<8x128xf32>
    %4 = tpu.iota {dimensions = array<i32: 0>} : vector<8x128xi32>
    %c8_i32 = arith.constant 8 : i32
    %5 = arith.muli %arg0, %c8_i32 : i32
    %6 = vector.broadcast %5 : i32 to vector<8x128xi32>
    %7 = arith.addi %4, %6 : vector<8x128xi32>
    %8 = tpu.iota {dimensions = array<i32: 1>} : vector<8x128xi32>
    %c128_i32 = arith.constant 128 : i32
    %9 = vector.broadcast %c128_i32 : i32 to vector<8x128xi32>
    %10 = arith.muli %7, %9 : vector<8x128xi32>
    %11 = arith.addi %10, %8 : vector<8x128xi32>
    %c16_i32 = arith.constant 16 : i32
    %12 = vector.broadcast %c16_i32 : i32 to vector<8x128xi32>
    %13 = arith.cmpi slt, %11, %12 : vector<8x128xi32>
    %14 = arith.cmpf one, %2, %2 : vector<8x128xf32>
    %cst = arith.constant dense<true> : vector<8x128xi1>
    %15 = arith.xori %14, %cst : vector<8x128xi1>
    %16 = arith.andi %13, %15 : vector<8x128xi1>
    %17 = arith.subf %0, %1 : vector<8x128xf32>
    %18 = math.exp %17 : vector<8x128xf32>
    %19 = arith.mulf %3, %18 : vector<8x128xf32>
    %cst_7 = arith.constant 0.000000e+00 : f32
    %20 = vector.broadcast %cst_7 : f32 to vector<8x128xf32>
    %21 = arith.minimumf %1, %20 : vector<8x128xf32>
    %22 = math.absf %1 : vector<8x128xf32>
    %cst_8 = arith.constant 0.000000e+00 : f32
    %23 = vector.broadcast %cst_8 : f32 to vector<8x128xf32>
    %24 = arith.subf %23, %22 : vector<8x128xf32>
    %25 = math.exp %24 : vector<8x128xf32>
    %cst_9 = arith.constant 1.000000e+00 : f32
    %26 = vector.broadcast %cst_9 : f32 to vector<8x128xf32>
    %27 = arith.addf %26, %25 : vector<8x128xf32>
    %28 = math.log %27 : vector<8x128xf32>
    %29 = arith.subf %21, %28 : vector<8x128xf32>
    %30 = arith.subf %29, %1 : vector<8x128xf32>
    %31 = arith.mulf %19, %30 : vector<8x128xf32>
    %32 = arith.mulf %2, %29 : vector<8x128xf32>
    %33 = arith.addf %31, %32 : vector<8x128xf32>
    %34 = arith.addf %19, %2 : vector<8x128xf32>
    %cst_10 = arith.constant 8.000000e+00 : f32
    %35 = vector.broadcast %cst_10 : f32 to vector<8x128xf32>
    %36 = arith.cmpf olt, %34, %35 : vector<8x128xf32>
    %cst_11 = arith.constant 8.000000e+00 : f32
    %37 = vector.broadcast %cst_11 : f32 to vector<8x128xf32>
    %38 = arith.minimumf %34, %37 : vector<8x128xf32>
    %cst_12 = arith.constant 1.000000e+00 : f32
    %39 = vector.broadcast %cst_12 : f32 to vector<8x128xf32>
    %40 = arith.addf %38, %39 : vector<8x128xf32>
    %41 = arith.mulf %38, %40 : vector<8x128xf32>
    %cst_13 = arith.constant 2.000000e+00 : f32
    %42 = vector.broadcast %cst_13 : f32 to vector<8x128xf32>
    %43 = arith.addf %38, %42 : vector<8x128xf32>
    %44 = arith.mulf %41, %43 : vector<8x128xf32>
    %cst_14 = arith.constant 3.000000e+00 : f32
    %45 = vector.broadcast %cst_14 : f32 to vector<8x128xf32>
    %46 = arith.addf %38, %45 : vector<8x128xf32>
    %47 = arith.mulf %44, %46 : vector<8x128xf32>
    %cst_15 = arith.constant 4.000000e+00 : f32
    %48 = vector.broadcast %cst_15 : f32 to vector<8x128xf32>
    %49 = arith.addf %38, %48 : vector<8x128xf32>
    %50 = arith.mulf %47, %49 : vector<8x128xf32>
    %cst_16 = arith.constant 5.000000e+00 : f32
    %51 = vector.broadcast %cst_16 : f32 to vector<8x128xf32>
    %52 = arith.addf %38, %51 : vector<8x128xf32>
    %53 = arith.mulf %50, %52 : vector<8x128xf32>
    %cst_17 = arith.constant 6.000000e+00 : f32
    %54 = vector.broadcast %cst_17 : f32 to vector<8x128xf32>
    %55 = arith.addf %38, %54 : vector<8x128xf32>
    %56 = arith.mulf %53, %55 : vector<8x128xf32>
    %cst_18 = arith.constant 7.000000e+00 : f32
    %57 = vector.broadcast %cst_18 : f32 to vector<8x128xf32>
    %58 = arith.addf %38, %57 : vector<8x128xf32>
    %59 = arith.mulf %56, %58 : vector<8x128xf32>
    %60 = math.log %59 : vector<8x128xf32>
    %cst_19 = arith.constant 0.000000e+00 : f32
    %61 = vector.broadcast %cst_19 : f32 to vector<8x128xf32>
    %62 = arith.select %36, %60, %61 : vector<8x128xi1>, vector<8x128xf32>
    %cst_20 = arith.constant 8.000000e+00 : f32
    %63 = vector.broadcast %cst_20 : f32 to vector<8x128xf32>
    %64 = arith.addf %34, %63 : vector<8x128xf32>
    %65 = arith.select %36, %64, %34 : vector<8x128xi1>, vector<8x128xf32>
    %66 = tpu.reciprocal %65 {approx = true} : vector<8x128xf32> -> vector<8x128xf32>
    %67 = arith.mulf %65, %66 : vector<8x128xf32>
    %cst_21 = arith.constant 2.000000e+00 : f32
    %68 = vector.broadcast %cst_21 : f32 to vector<8x128xf32>
    %69 = arith.subf %68, %67 : vector<8x128xf32>
    %70 = arith.mulf %66, %69 : vector<8x128xf32>
    %71 = arith.mulf %70, %70 : vector<8x128xf32>
    %cst_22 = arith.constant 7.93650805E-4 : f32
    %72 = vector.broadcast %cst_22 : f32 to vector<8x128xf32>
    %73 = arith.mulf %71, %72 : vector<8x128xf32>
    %cst_23 = arith.constant -0.00277777785 : f32
    %74 = vector.broadcast %cst_23 : f32 to vector<8x128xf32>
    %75 = arith.addf %74, %73 : vector<8x128xf32>
    %76 = arith.mulf %71, %75 : vector<8x128xf32>
    %cst_24 = arith.constant 0.0833333358 : f32
    %77 = vector.broadcast %cst_24 : f32 to vector<8x128xf32>
    %78 = arith.addf %77, %76 : vector<8x128xf32>
    %79 = arith.mulf %70, %78 : vector<8x128xf32>
    %cst_25 = arith.constant 5.000000e-01 : f32
    %80 = vector.broadcast %cst_25 : f32 to vector<8x128xf32>
    %81 = arith.subf %65, %80 : vector<8x128xf32>
    %82 = math.log %65 : vector<8x128xf32>
    %83 = arith.mulf %81, %82 : vector<8x128xf32>
    %84 = arith.subf %83, %65 : vector<8x128xf32>
    %cst_26 = arith.constant 0.918938517 : f32
    %85 = vector.broadcast %cst_26 : f32 to vector<8x128xf32>
    %86 = arith.addf %84, %85 : vector<8x128xf32>
    %87 = arith.addf %86, %79 : vector<8x128xf32>
    %88 = arith.subf %87, %62 : vector<8x128xf32>
    %89 = arith.addf %33, %88 : vector<8x128xf32>
    %cst_27 = arith.constant 1.000000e+00 : f32
    %90 = vector.broadcast %cst_27 : f32 to vector<8x128xf32>
    %91 = arith.addf %90, %2 : vector<8x128xf32>
    %cst_28 = arith.constant 8.000000e+00 : f32
    %92 = vector.broadcast %cst_28 : f32 to vector<8x128xf32>
    %93 = arith.cmpf olt, %91, %92 : vector<8x128xf32>
    %cst_29 = arith.constant 8.000000e+00 : f32
    %94 = vector.broadcast %cst_29 : f32 to vector<8x128xf32>
    %95 = arith.minimumf %91, %94 : vector<8x128xf32>
    %cst_30 = arith.constant 1.000000e+00 : f32
    %96 = vector.broadcast %cst_30 : f32 to vector<8x128xf32>
    %97 = arith.addf %95, %96 : vector<8x128xf32>
    %98 = arith.mulf %95, %97 : vector<8x128xf32>
    %cst_31 = arith.constant 2.000000e+00 : f32
    %99 = vector.broadcast %cst_31 : f32 to vector<8x128xf32>
    %100 = arith.addf %95, %99 : vector<8x128xf32>
    %101 = arith.mulf %98, %100 : vector<8x128xf32>
    %cst_32 = arith.constant 3.000000e+00 : f32
    %102 = vector.broadcast %cst_32 : f32 to vector<8x128xf32>
    %103 = arith.addf %95, %102 : vector<8x128xf32>
    %104 = arith.mulf %101, %103 : vector<8x128xf32>
    %cst_33 = arith.constant 4.000000e+00 : f32
    %105 = vector.broadcast %cst_33 : f32 to vector<8x128xf32>
    %106 = arith.addf %95, %105 : vector<8x128xf32>
    %107 = arith.mulf %104, %106 : vector<8x128xf32>
    %cst_34 = arith.constant 5.000000e+00 : f32
    %108 = vector.broadcast %cst_34 : f32 to vector<8x128xf32>
    %109 = arith.addf %95, %108 : vector<8x128xf32>
    %110 = arith.mulf %107, %109 : vector<8x128xf32>
    %cst_35 = arith.constant 6.000000e+00 : f32
    %111 = vector.broadcast %cst_35 : f32 to vector<8x128xf32>
    %112 = arith.addf %95, %111 : vector<8x128xf32>
    %113 = arith.mulf %110, %112 : vector<8x128xf32>
    %cst_36 = arith.constant 7.000000e+00 : f32
    %114 = vector.broadcast %cst_36 : f32 to vector<8x128xf32>
    %115 = arith.addf %95, %114 : vector<8x128xf32>
    %116 = arith.mulf %113, %115 : vector<8x128xf32>
    %117 = math.log %116 : vector<8x128xf32>
    %cst_37 = arith.constant 0.000000e+00 : f32
    %118 = vector.broadcast %cst_37 : f32 to vector<8x128xf32>
    %119 = arith.select %93, %117, %118 : vector<8x128xi1>, vector<8x128xf32>
    %cst_38 = arith.constant 8.000000e+00 : f32
    %120 = vector.broadcast %cst_38 : f32 to vector<8x128xf32>
    %121 = arith.addf %91, %120 : vector<8x128xf32>
    %122 = arith.select %93, %121, %91 : vector<8x128xi1>, vector<8x128xf32>
    %123 = tpu.reciprocal %122 {approx = true} : vector<8x128xf32> -> vector<8x128xf32>
    %124 = arith.mulf %122, %123 : vector<8x128xf32>
    %cst_39 = arith.constant 2.000000e+00 : f32
    %125 = vector.broadcast %cst_39 : f32 to vector<8x128xf32>
    %126 = arith.subf %125, %124 : vector<8x128xf32>
    %127 = arith.mulf %123, %126 : vector<8x128xf32>
    %128 = arith.mulf %127, %127 : vector<8x128xf32>
    %cst_40 = arith.constant 7.93650805E-4 : f32
    %129 = vector.broadcast %cst_40 : f32 to vector<8x128xf32>
    %130 = arith.mulf %128, %129 : vector<8x128xf32>
    %cst_41 = arith.constant -0.00277777785 : f32
    %131 = vector.broadcast %cst_41 : f32 to vector<8x128xf32>
    %132 = arith.addf %131, %130 : vector<8x128xf32>
    %133 = arith.mulf %128, %132 : vector<8x128xf32>
    %cst_42 = arith.constant 0.0833333358 : f32
    %134 = vector.broadcast %cst_42 : f32 to vector<8x128xf32>
    %135 = arith.addf %134, %133 : vector<8x128xf32>
    %136 = arith.mulf %127, %135 : vector<8x128xf32>
    %cst_43 = arith.constant 5.000000e-01 : f32
    %137 = vector.broadcast %cst_43 : f32 to vector<8x128xf32>
    %138 = arith.subf %122, %137 : vector<8x128xf32>
    %139 = math.log %122 : vector<8x128xf32>
    %140 = arith.mulf %138, %139 : vector<8x128xf32>
    %141 = arith.subf %140, %122 : vector<8x128xf32>
    %cst_44 = arith.constant 0.918938517 : f32
    %142 = vector.broadcast %cst_44 : f32 to vector<8x128xf32>
    %143 = arith.addf %141, %142 : vector<8x128xf32>
    %144 = arith.addf %143, %136 : vector<8x128xf32>
    %145 = arith.subf %144, %119 : vector<8x128xf32>
    %146 = arith.subf %89, %145 : vector<8x128xf32>
    %cst_45 = arith.constant 8.000000e+00 : f32
    %147 = vector.broadcast %cst_45 : f32 to vector<8x128xf32>
    %148 = arith.cmpf olt, %19, %147 : vector<8x128xf32>
    %cst_46 = arith.constant 8.000000e+00 : f32
    %149 = vector.broadcast %cst_46 : f32 to vector<8x128xf32>
    %150 = arith.minimumf %19, %149 : vector<8x128xf32>
    %cst_47 = arith.constant 1.000000e+00 : f32
    %151 = vector.broadcast %cst_47 : f32 to vector<8x128xf32>
    %152 = arith.addf %150, %151 : vector<8x128xf32>
    %153 = arith.mulf %150, %152 : vector<8x128xf32>
    %cst_48 = arith.constant 2.000000e+00 : f32
    %154 = vector.broadcast %cst_48 : f32 to vector<8x128xf32>
    %155 = arith.addf %150, %154 : vector<8x128xf32>
    %156 = arith.mulf %153, %155 : vector<8x128xf32>
    %cst_49 = arith.constant 3.000000e+00 : f32
    %157 = vector.broadcast %cst_49 : f32 to vector<8x128xf32>
    %158 = arith.addf %150, %157 : vector<8x128xf32>
    %159 = arith.mulf %156, %158 : vector<8x128xf32>
    %cst_50 = arith.constant 4.000000e+00 : f32
    %160 = vector.broadcast %cst_50 : f32 to vector<8x128xf32>
    %161 = arith.addf %150, %160 : vector<8x128xf32>
    %162 = arith.mulf %159, %161 : vector<8x128xf32>
    %cst_51 = arith.constant 5.000000e+00 : f32
    %163 = vector.broadcast %cst_51 : f32 to vector<8x128xf32>
    %164 = arith.addf %150, %163 : vector<8x128xf32>
    %165 = arith.mulf %162, %164 : vector<8x128xf32>
    %cst_52 = arith.constant 6.000000e+00 : f32
    %166 = vector.broadcast %cst_52 : f32 to vector<8x128xf32>
    %167 = arith.addf %150, %166 : vector<8x128xf32>
    %168 = arith.mulf %165, %167 : vector<8x128xf32>
    %cst_53 = arith.constant 7.000000e+00 : f32
    %169 = vector.broadcast %cst_53 : f32 to vector<8x128xf32>
    %170 = arith.addf %150, %169 : vector<8x128xf32>
    %171 = arith.mulf %168, %170 : vector<8x128xf32>
    %172 = math.log %171 : vector<8x128xf32>
    %cst_54 = arith.constant 0.000000e+00 : f32
    %173 = vector.broadcast %cst_54 : f32 to vector<8x128xf32>
    %174 = arith.select %148, %172, %173 : vector<8x128xi1>, vector<8x128xf32>
    %cst_55 = arith.constant 8.000000e+00 : f32
    %175 = vector.broadcast %cst_55 : f32 to vector<8x128xf32>
    %176 = arith.addf %19, %175 : vector<8x128xf32>
    %177 = arith.select %148, %176, %19 : vector<8x128xi1>, vector<8x128xf32>
    %178 = tpu.reciprocal %177 {approx = true} : vector<8x128xf32> -> vector<8x128xf32>
    %179 = arith.mulf %177, %178 : vector<8x128xf32>
    %cst_56 = arith.constant 2.000000e+00 : f32
    %180 = vector.broadcast %cst_56 : f32 to vector<8x128xf32>
    %181 = arith.subf %180, %179 : vector<8x128xf32>
    %182 = arith.mulf %178, %181 : vector<8x128xf32>
    %183 = arith.mulf %182, %182 : vector<8x128xf32>
    %cst_57 = arith.constant 7.93650805E-4 : f32
    %184 = vector.broadcast %cst_57 : f32 to vector<8x128xf32>
    %185 = arith.mulf %183, %184 : vector<8x128xf32>
    %cst_58 = arith.constant -0.00277777785 : f32
    %186 = vector.broadcast %cst_58 : f32 to vector<8x128xf32>
    %187 = arith.addf %186, %185 : vector<8x128xf32>
    %188 = arith.mulf %183, %187 : vector<8x128xf32>
    %cst_59 = arith.constant 0.0833333358 : f32
    %189 = vector.broadcast %cst_59 : f32 to vector<8x128xf32>
    %190 = arith.addf %189, %188 : vector<8x128xf32>
    %191 = arith.mulf %182, %190 : vector<8x128xf32>
    %cst_60 = arith.constant 5.000000e-01 : f32
    %192 = vector.broadcast %cst_60 : f32 to vector<8x128xf32>
    %193 = arith.subf %177, %192 : vector<8x128xf32>
    %194 = math.log %177 : vector<8x128xf32>
    %195 = arith.mulf %193, %194 : vector<8x128xf32>
    %196 = arith.subf %195, %177 : vector<8x128xf32>
    %cst_61 = arith.constant 0.918938517 : f32
    %197 = vector.broadcast %cst_61 : f32 to vector<8x128xf32>
    %198 = arith.addf %196, %197 : vector<8x128xf32>
    %199 = arith.addf %198, %191 : vector<8x128xf32>
    %200 = arith.subf %199, %174 : vector<8x128xf32>
    %201 = arith.subf %146, %200 : vector<8x128xf32>
    %cst_62 = arith.constant 0.000000e+00 : f32
    %202 = vector.broadcast %cst_62 : f32 to vector<8x128xf32>
    %203 = arith.select %16, %201, %202 : vector<8x128xi1>, vector<8x128xf32>
    %204 = arith.extui %16 : vector<8x128xi1> to vector<8x128xi32>
    %205 = arith.sitofp %204 : vector<8x128xi32> to vector<8x128xf32>
    %206 = vector.shape_cast %203 : vector<8x128xf32> to vector<1x8x128xf32>
    %cst_63 = arith.constant dense<0.000000e+00> : vector<8x128xf32>
    %207 = vector.multi_reduction <add>, %206, %cst_63 [0] : vector<1x8x128xf32> to vector<8x128xf32>
    %c0_64 = arith.constant 0 : index
    %c0_65 = arith.constant 0 : index
    %c0_66 = arith.constant 0 : index
    %c0_67 = arith.constant 0 : index
    %208 = vector.load %arg5[%c0_64, %c0_65, %c0_66, %c0_67] : memref<1x2x8x128xf32, #tpu.memory_space<vmem>>, vector<1x1x8x128xf32>
    %209 = vector.shape_cast %208 : vector<1x1x8x128xf32> to vector<8x128xf32>
    %210 = vector.shape_cast %207 : vector<8x128xf32> to vector<1x1x8x128xf32>
    tpu.vector_store %arg5[%c0_64, %c0_65, %c0_66, %c0_67], %210 {strides = array<i32>} : memref<1x2x8x128xf32, #tpu.memory_space<vmem>>, vector<1x1x8x128xf32>,
    %211 = vector.shape_cast %205 : vector<8x128xf32> to vector<1x8x128xf32>
    %cst_68 = arith.constant dense<0.000000e+00> : vector<8x128xf32>
    %212 = vector.multi_reduction <add>, %211, %cst_68 [0] : vector<1x8x128xf32> to vector<8x128xf32>
    %c0_69 = arith.constant 0 : index
    %c1 = arith.constant 1 : index
    %c0_70 = arith.constant 0 : index
    %c0_71 = arith.constant 0 : index
    %213 = vector.load %arg5[%c0_69, %c1, %c0_70, %c0_71] : memref<1x2x8x128xf32, #tpu.memory_space<vmem>>, vector<1x1x8x128xf32>
    %214 = vector.shape_cast %213 : vector<1x1x8x128xf32> to vector<8x128xf32>
    %215 = vector.shape_cast %212 : vector<8x128xf32> to vector<1x1x8x128xf32>
    tpu.vector_store %arg5[%c0_69, %c1, %c0_70, %c0_71], %215 {strides = array<i32>} : memref<1x2x8x128xf32, #tpu.memory_space<vmem>>, vector<1x1x8x128xf32>,
    return
  }
  func.func @transform_0(%arg0: i32) -> (i32, i32) {
    %c0_i32 = arith.constant 0 : i32
    %c0_i32_0 = arith.constant 0 : i32
    return %arg0, %c0_i32 : i32, i32
  }
  func.func @transform_1(%arg0: i32) -> (i32, i32) {
    %c0_i32 = arith.constant 0 : i32
    %c0_i32_0 = arith.constant 0 : i32
    return %arg0, %c0_i32 : i32, i32
  }
  func.func @transform_2(%arg0: i32) -> (i32, i32) {
    %c0_i32 = arith.constant 0 : i32
    %c0_i32_0 = arith.constant 0 : i32
    return %arg0, %c0_i32 : i32, i32
  }
  func.func @transform_3(%arg0: i32) -> (i32, i32) {
    %c0_i32 = arith.constant 0 : i32
    %c0_i32_0 = arith.constant 0 : i32
    return %arg0, %c0_i32 : i32, i32
  }
  func.func @transform_4(%arg0: i32) -> (i32, i32, i32, i32) {
    %c0_i32 = arith.constant 0 : i32
    %c0_i32_0 = arith.constant 0 : i32
    %c0_i32_1 = arith.constant 0 : i32
    %c0_i32_2 = arith.constant 0 : i32
    return %arg0, %c0_i32, %c0_i32_0, %c0_i32_1 : i32, i32, i32, i32
  }
}

</mosaic_0001>

<llo_original>
// kernel: negative_binomial_loss.1
$region0: #{negative_binomial_loss.1}
  #allocation0 [shape = 'u32[]', space=smem, size = 0x4, offset = 0x4, fixed_abs, tag = 'smem constant byte address 0x4 - core index']
  #allocation1 [shape = 'u32[144,128]{1,0:T(1,128)}', space=vmem, size = 0x12000, scoped, tag = 'internal scratch']
  %s0 = inlined_call_operand.vmem [shape: f32[8,128], index: 0, kind: input, shape index: {}]
  %s1 = inlined_call_operand.vmem [shape: f32[8,128], index: 1, kind: input, shape index: {}]
  %s2 = inlined_call_operand.vmem [shape: f32[8,128], index: 2, kind: input, shape index: {}]
  %s3 = inlined_call_operand.vmem [shape: f32[8,128], index: 3, kind: input, shape index: {}]
  %s4 = inlined_call_operand.vmem [shape: f32[1,2,8,128], index: 4, kind: output, shape index: {}]
  %s5 = sld [smem:[#allocation0]]
  $region26: #{negative_binomial_loss.1} parent=0
    _
  %s7 = ssub.s32 1, %s5
  %s8 = scalar_select 0, %s7, %s5
  // Predicated region
  $region2: #{negative_binomial_loss.1} parent=0 // pred_check
    _
  $region3: #{negative_binomial_loss.1} parent=0 // pred_check_branch
    %10 = sbr.rel (0) target = $region5
  $region4: #{negative_binomial_loss.1} parent=0 // pred_region
    _
  $region5: #{negative_binomial_loss.1} parent=0 // pred_fallthru
    _
  // Predicated region
  $region6: #{negative_binomial_loss.1} parent=0 // pred_check
    _
  $region7: #{negative_binomial_loss.1} parent=0 // pred_check_branch
    %12 = sbr.rel (0) target = $region9
  $region8: #{negative_binomial_loss.1} parent=0 // pred_region
    _
  $region9: #{negative_binomial_loss.1} parent=0 // pred_fallthru
    _
  // Predicated region
  $region10: #{negative_binomial_loss.1} parent=0 // pred_check
    _
  $region11: #{negative_binomial_loss.1} parent=0 // pred_check_branch
    %14 = sbr.rel (0) target = $region13
  $region12: #{negative_binomial_loss.1} parent=0 // pred_region
    _
  $region13: #{negative_binomial_loss.1} parent=0 // pred_fallthru
    _
  // Predicated region
  $region14: #{negative_binomial_loss.1} parent=0 // pred_check
    _
  $region15: #{negative_binomial_loss.1} parent=0 // pred_check_branch
    %16 = sbr.rel (0) target = $region17
  $region16: #{negative_binomial_loss.1} parent=0 // pred_region
    _
  $region17: #{negative_binomial_loss.1} parent=0 // pred_fallthru
    _
  %v17 = vld [vmem:[%s0] sm:$0xff]
  %v18 = vld [vmem:[%s1] sm:$0xff]
  %v19 = vld [vmem:[%s2] sm:$0xff]
  %v20 = vld [vmem:[%s3] sm:$0xff]
  %v21 = vlaneseq
  %v22 = vshrl.u32 %v21, 7
  %s23 = smul.u32 0, 8
  %v24 = vstv %s23
  %v25 = vadd.s32 %v22, %v24
  %v26 = vlaneseq
  %v27 = vand.u32 %v26, 127
  %v28 = vmul.u32 %v25, 128
  %v29 = vadd.s32 %v28, %v27
  %vm30 = vcmp.lt.s32.totalorder %v29, 16
  %vm31 = vcmp.ne.f32.partialorder %v19, %v19
  %vm32 = vmxor %vm31, 1
  %vm33 = vmand %vm30, %vm32
  %v34 = vsub.f32 %v17, %v18
  %v35 = vmul.f32 %v34, 1.442695
  %v36 = vpow.pop %v35
  %v37 = vmul.f32 %v20, %v36
  %v38 = vmin.f32 %v18, 0.0
  %v39 = vand.u32 2147483647, %v18
  %v40 = vsub.f32 0.0, %v39
  %v41 = vmul.f32 %v40, 1.442695
  %v42 = vpow.pop %v41
  %v43 = vadd.f32 %v42, 1.0
  %v44 = vlog2.pop %v43
  %v45 = vmul.f32 %v44, 0.6931472
  %v46 = vsub.f32 %v38, %v45
  %v47 = vsub.f32 %v46, %v18
  %v48 = vmul.f32 %v37, %v47
  %v49 = vmul.f32 %v19, %v46
  %v50 = vadd.f32 %v48, %v49
  %v51 = vadd.f32 %v37, %v19
  %vm52 = vcmp.lt.f32.partialorder %v51, 8.0
  %v53 = vmin.f32 %v51, 8.0
  %v54 = vadd.f32 %v53, 1.0
  %v55 = vmul.f32 %v53, %v54
  %v56 = vadd.f32 %v53, 2.0
  %v57 = vmul.f32 %v55, %v56
  %v58 = vadd.f32 %v53, 3.0
  %v59 = vmul.f32 %v57, %v58
  %v60 = vadd.f32 %v53, 4.0
  %v61 = vmul.f32 %v59, %v60
  %v62 = vadd.f32 %v53, 5.0
  %v63 = vmul.f32 %v61, %v62
  %v64 = vadd.f32 %v53, 6.0
  %v65 = vmul.f32 %v63, %v64
  %v66 = vadd.f32 %v53, 7.0
  %v67 = vmul.f32 %v65, %v66
  %v68 = vlog2.pop %v67
  %v69 = vmul.f32 %v68, 0.6931472
  %v70 = vsel %vm52, %v69, 0.0
  %v71 = vadd.f32 %v51, 8.0
  %v72 = vsel %vm52, %v71, %v51
  %v73 = vrcp.pop %v72
  %v74 = vmul.f32 %v72, %v73
  %v75 = vsub.f32 2.0, %v74
  %v76 = vmul.f32 %v73, %v75
  %v77 = vmul.f32 %v76, %v76
  %v78 = vmul.f32 %v77, 0.0007936508
  %v79 = vadd.f32 %v78, -0.0027777778
  %v80 = vmul.f32 %v77, %v79
  %v81 = vadd.f32 %v80, 0.083333336
  %v82 = vmul.f32 %v76, %v81
  %v83 = vsub.f32 %v72, 0.5
  %v84 = vlog2.pop %v72
  %v85 = vmul.f32 %v84, 0.6931472
  %v86 = vmul.f32 %v83, %v85
  %v87 = vsub.f32 %v86, %v72
  %v88 = vadd.f32 %v87, 0.9189385
  %v89 = vadd.f32 %v88, %v82
  %v90 = vsub.f32 %v89, %v70
  %v91 = vadd.f32 %v50, %v90
  %v92 = vadd.f32 %v19, 1.0
  %vm93 = vcmp.lt.f32.partialorder %v92, 8.0
  %v94 = vmin.f32 %v92, 8.0
  %v95 = vadd.f32 %v94, 1.0
  %v96 = vmul.f32 %v94, %v95
  %v97 = vadd.f32 %v94, 2.0
  %v98 = vmul.f32 %v96, %v97
  %v99 = vadd.f32 %v94, 3.0
  %v100 = vmul.f32 %v98, %v99
  %v101 = vadd.f32 %v94, 4.0
  %v102 = vmul.f32 %v100, %v101
  %v103 = vadd.f32 %v94, 5.0
  %v104 = vmul.f32 %v102, %v103
  %v105 = vadd.f32 %v94, 6.0
  %v106 = vmul.f32 %v104, %v105
  %v107 = vadd.f32 %v94, 7.0
  %v108 = vmul.f32 %v106, %v107
  %v109 = vlog2.pop %v108
  %v110 = vmul.f32 %v109, 0.6931472
  %v111 = vsel %vm93, %v110, 0.0
  %v112 = vadd.f32 %v92, 8.0
  %v113 = vsel %vm93, %v112, %v92
  %v114 = vrcp.pop %v113
  %v115 = vmul.f32 %v113, %v114
  %v116 = vsub.f32 2.0, %v115
  %v117 = vmul.f32 %v114, %v116
  %v118 = vmul.f32 %v117, %v117
  %v119 = vmul.f32 %v118, 0.0007936508
  %v120 = vadd.f32 %v119, -0.0027777778
  %v121 = vmul.f32 %v118, %v120
  %v122 = vadd.f32 %v121, 0.083333336
  %v123 = vmul.f32 %v117, %v122
  %v124 = vsub.f32 %v113, 0.5
  %v125 = vlog2.pop %v113
  %v126 = vmul.f32 %v125, 0.6931472
  %v127 = vmul.f32 %v124, %v126
  %v128 = vsub.f32 %v127, %v113
  %v129 = vadd.f32 %v128, 0.9189385
  %v130 = vadd.f32 %v129, %v123
  %v131 = vsub.f32 %v130, %v111
  %v132 = vsub.f32 %v91, %v131
  %vm133 = vcmp.lt.f32.partialorder %v37, 8.0
  %v134 = vmin.f32 %v37, 8.0
  %v135 = vadd.f32 %v134, 1.0
  %v136 = vmul.f32 %v134, %v135
  %v137 = vadd.f32 %v134, 2.0
  %v138 = vmul.f32 %v136, %v137
  %v139 = vadd.f32 %v134, 3.0
  %v140 = vmul.f32 %v138, %v139
  %v141 = vadd.f32 %v134, 4.0
  %v142 = vmul.f32 %v140, %v141
  %v143 = vadd.f32 %v134, 5.0
  %v144 = vmul.f32 %v142, %v143
  %v145 = vadd.f32 %v134, 6.0
  %v146 = vmul.f32 %v144, %v145
  %v147 = vadd.f32 %v134, 7.0
  %v148 = vmul.f32 %v146, %v147
  %v149 = vlog2.pop %v148
  %v150 = vmul.f32 %v149, 0.6931472
  %v151 = vsel %vm133, %v150, 0.0
  %v152 = vadd.f32 %v37, 8.0
  %v153 = vsel %vm133, %v152, %v37
  %v154 = vrcp.pop %v153
  %v155 = vmul.f32 %v153, %v154
  %v156 = vsub.f32 2.0, %v155
  %v157 = vmul.f32 %v154, %v156
  %v158 = vmul.f32 %v157, %v157
  %v159 = vmul.f32 %v158, 0.0007936508
  %v160 = vadd.f32 %v159, -0.0027777778
  %v161 = vmul.f32 %v158, %v160
  %v162 = vadd.f32 %v161, 0.083333336
  %v163 = vmul.f32 %v157, %v162
  %v164 = vsub.f32 %v153, 0.5
  %v165 = vlog2.pop %v153
  %v166 = vmul.f32 %v165, 0.6931472
  %v167 = vmul.f32 %v164, %v166
  %v168 = vsub.f32 %v167, %v153
  %v169 = vadd.f32 %v168, 0.9189385
  %v170 = vadd.f32 %v169, %v163
  %v171 = vsub.f32 %v170, %v151
  %v172 = vsub.f32 %v132, %v171
  %v173 = vsel %vm33, %v172, 0.0
  %v174 = vsel %vm33, 1, 0
  %v175 = vcvt.s32.f32 %v174
  %v176 = vadd.f32 %v173, 0.0
  %177 = vst [vmem:[%s4] sm:$0xff] %v176
  %v178 = vadd.f32 %v175, 0.0
  %s179 = scalar_lea.vmem %s4, 8
  %180 = vst [vmem:[%s179] sm:$0xff] %v178
  // Predicated region
  $region18: #{negative_binomial_loss.1} parent=0 // pred_check
    _
  $region19: #{negative_binomial_loss.1} parent=0 // pred_check_branch
    %182 = sbr.rel (0) target = $region21
  $region20: #{negative_binomial_loss.1} parent=0 // pred_region
    _
  $region21: #{negative_binomial_loss.1} parent=0 // pred_fallthru
    _
  // Predicated region
  $region22: #{negative_binomial_loss.1} parent=0 // pred_check
    _
  $region23: #{negative_binomial_loss.1} parent=0 // pred_check_branch
    %184 = sbr.rel (0) target = $region25
  $region24: #{negative_binomial_loss.1} parent=0 // pred_region
    _
  $region25: #{negative_binomial_loss.1} parent=0 // pred_fallthru
    _

</llo_original>
